<compile_context>
chip_gen: v6e
topology: v6e:2x2x1
jax: 0.10.0
libtpu: 0.0.40
codegen_flags: <defaults>
</compile_context>

<pallas_src>
import functools

import jax
import jax.numpy as jnp
from jax import lax
from jax.experimental import pallas as pl
from jax.experimental.pallas import tpu as pltpu

THRESH = 1e-8     # signed-sqrt stability constant (module default)
L2_EPS = 1e-12    # torch.nn.functional.normalize default eps


# ---------------------------------------------------------------------------
# In-kernel helpers
# ---------------------------------------------------------------------------
def _g_block_partial(x_ref, i, tm):
    """Un-scaled (TM, C) partial bilinear block for the current HW tile.

    x_ref : (1, C, TK) VMEM ref (resident per batch / per K tile).
    The (TM, TK) LHS row block is sliced straight out of the resident ref, so
    x is streamed from HBM only once per pass.  Contracting the lane axis of
    BOTH operands is the q·k^T pattern; the MXU handles the transposed
    stationary operand natively (no materialized transpose).
    """
    start = pl.multiple_of(i * tm, tm)
    xr = x_ref[0, pl.ds(start, tm), :]        # (TM, TK) row block
    xf = x_ref[0]                             # (C,  TK) full tile
    return lax.dot_general(
        xr, xf,
        dimension_numbers=(((1,), (1,)), ((), ())),
        preferred_element_type=jnp.float32,
    )


def _signed_sqrt(g):
    # NOTE: sign(0) == 0 makes y == 0 where g == 0 while the factored norm
    # still counts +thresh for that element; the worst-case overestimate of
    # sum(y^2) is C^2 * 1e-8 -- negligible, and zero for generic inputs.
    return jnp.sign(g) * jnp.sqrt(jnp.abs(g) + THRESH)


# ---------------------------------------------------------------------------
# Pass 1: per-row sums of |g|  (no y intermediate is ever stored)
# ---------------------------------------------------------------------------
def _norm_kernel(x_ref, rowabs_ref, *, tm, inv_hw):
    i = pl.program_id(1)
    g = _g_block_partial(x_ref, i, tm) * inv_hw
    # (TM, 1) masked store; C*4 bytes per batch -> negligible HBM traffic.
    rowabs_ref[0] = jnp.sum(jnp.abs(g), axis=1, keepdims=True)


def _norm_kernel_ktiled(x_ref, rowabs_ref, acc_ref, *, tm, inv_hw):
    i = pl.program_id(1)
    k = pl.program_id(2)

    @pl.when(k == 0)
    def _():
        acc_ref[...] = jnp.zeros_like(acc_ref)

    acc_ref[...] += _g_block_partial(x_ref, i, tm)

    @pl.when(k == pl.num_programs(2) - 1)
    def _():
        g = acc_ref[...] * inv_hw
        rowabs_ref[0] = jnp.sum(jnp.abs(g), axis=1, keepdims=True)


# ---------------------------------------------------------------------------
# Pass 2: recompute the block, signed sqrt, scale by 1/norm, single write
# ---------------------------------------------------------------------------
def _out_kernel(x_ref, inv_ref, o_ref, *, tm, inv_hw):
    b = pl.program_id(0)
    i = pl.program_id(1)
    g = _g_block_partial(x_ref, i, tm) * inv_hw
    o_ref[0] = (_signed_sqrt(g) * inv_ref[b]).astype(o_ref.dtype)


def _out_kernel_ktiled(x_ref, inv_ref, o_ref, acc_ref, *, tm, inv_hw):
    b = pl.program_id(0)
    i = pl.program_id(1)
    k = pl.program_id(2)

    @pl.when(k == 0)
    def _():
        acc_ref[...] = jnp.zeros_like(acc_ref)

    acc_ref[...] += _g_block_partial(x_ref, i, tm)

    @pl.when(k == pl.num_programs(2) - 1)
    def _():
        g = acc_ref[...] * inv_hw
        o_ref[0] = (_signed_sqrt(g) * inv_ref[b]).astype(o_ref.dtype)


# ---------------------------------------------------------------------------
# Tiling / VMEM budgeting
# ---------------------------------------------------------------------------
def _pick_block_rows(c):
    # Largest row tile <= 256 that divides C (bounds per-step VMEM at the
    # real input_dim=2048); fall back to the full C for tiny channel counts.
    for t in (256, 128, 64, 32, 16, 8):
        if c % t == 0:
            return t
    return c


def _vmem_capacity_bytes():
    try:
        return int(pltpu.get_tpu_info().vmem_capacity_bytes)
    except Exception:
        return 64 * 2**20      # conservative: v7x per-TensorCore VMEM


def _vmem_need_bytes(c, tm, tk, nk, in_bytes):
    need = 2 * c * tk * in_bytes          # double-buffered resident x tile
    need += 2 * tm * c * 4                # double-buffered output block (pass 2)
    need += 2 * tm * 4 * 8                # rowabs block (generous / padded)
    if nk > 1:
        need += tm * c * 4                # f32 accumulator scratch
    need += 4 * tm * c * 4                # g / |g| / y compute temporaries
    need += c * tk * in_bytes             # compiler slack
    return need


# ---------------------------------------------------------------------------
# Wrapper
# ---------------------------------------------------------------------------
def bcnn_forward(x, *, matmul_dtype=jnp.bfloat16, block_rows=None, block_hw=None):
    """x: (B, C, H, W) -> (B, C*C)   (is_vec=True path of the module).

    matmul_dtype: MXU input dtype.  Default bfloat16 (f32 accumulation and
      f32 sqrt/normalize); expect up to ~1e-2 absolute error on the
      normalized output.  Pass jnp.float32 for the tight-tolerance path.
    """
    B, C, H, W = x.shape
    HW = H * W
    out_dtype = x.dtype

    x2 = x.reshape(B, C, HW)
    if x2.dtype != matmul_dtype:
        x2 = x2.astype(matmul_dtype)
    in_bytes = jnp.dtype(matmul_dtype).itemsize

    TM = block_rows if block_rows is not None else _pick_block_rows(C)
    if C % TM != 0:
        raise ValueError(f"block_rows={TM} must divide C={C}")
    NT = C // TM

    cap = _vmem_capacity_bytes()
    budget = int(0.8 * cap)

    if block_hw is None:
        TK = HW
        if _vmem_need_bytes(C, TM, TK, 1, in_bytes) > budget:
            # Fall back to tiling the contraction (HW) axis with the largest
            # lane-legal divisor that fits the budget (x is then re-read once
            # per row tile -- acceptable as a VMEM-pressure escape hatch).
            for d in range(HW // 128, 0, -1):
                tk = d * 128
                if HW % tk == 0 and _vmem_need_bytes(
                        C, TM, tk, HW // tk, in_bytes) <= budget:
                    TK = tk
                    break
    else:
        TK = block_hw
    if HW % TK != 0:
        raise ValueError(f"block_hw={TK} must divide H*W={HW}")
    if TK != HW and TK % 128 != 0:
        raise ValueError(f"block_hw={TK} must be a multiple of 128 (or the full {HW})")
    NK = HW // TK

    need = _vmem_need_bytes(C, TM, TK, NK, in_bytes)
    vmem_limit = int(min(max(need * 5 // 4, 8 * 2**20), int(0.9 * cap)))

    inv_hw = 1.0 / HW
    matmul_flops = 2 * B * C * C * HW

    # -------- Pass 1: per-row |g| sums only (tiny output, no y store).
    if NK == 1:
        norm_kernel = functools.partial(_norm_kernel, tm=TM, inv_hw=inv_hw)
        grid1 = (B, NT)
        x_spec1 = pl.BlockSpec((1, C, TK), lambda b, i: (b, 0, 0))       # resident over i
        rowabs_spec = pl.BlockSpec((1, TM, 1), lambda b, i: (b, i, 0))
        scratch1 = []
        sem1 = ("parallel", "parallel")
    else:
        norm_kernel = functools.partial(_norm_kernel_ktiled, tm=TM, inv_hw=inv_hw)
        grid1 = (B, NT, NK)
        x_spec1 = pl.BlockSpec((1, C, TK), lambda b, i, k: (b, 0, k))
        rowabs_spec = pl.BlockSpec((1, TM, 1), lambda b, i, k: (b, i, 0))
        scratch1 = [pltpu.VMEM((TM, C), jnp.float32)]
        sem1 = ("parallel", "parallel", "arbitrary")

    rowabs = pl.pallas_call(
        norm_kernel,
        out_shape=jax.ShapeDtypeStruct((B, C, 1), jnp.float32),
        grid_spec=pltpu.PrefetchScalarGridSpec(
            num_scalar_prefetch=0,
            grid=grid1,
            in_specs=[x_spec1],
            out_specs=rowabs_spec,
            scratch_shapes=scratch1,
        ),
        compiler_params=pltpu.CompilerParams(
            dimension_semantics=sem1,
            vmem_limit_bytes=vmem_limit,
        ),
        cost_estimate=pl.CostEstimate(
            flops=int(matmul_flops + 2 * B * C * C),
            transcendentals=0,
            bytes_accessed=int(B * C * HW * in_bytes + B * C * 4),
        ),
    )(x2)

    # -------- Tiny (B,)-sized norm math: sum(y^2) = sum(|g|) + C^2 * thresh.
    sum_abs_g = jnp.sum(rowabs, axis=(1, 2))                         # (B,)
    norm = jnp.sqrt(sum_abs_g + (C * C) * THRESH)
    inv = (1.0 / jnp.maximum(norm, L2_EPS)).astype(jnp.float32)      # (B,)

    # -------- Pass 2: recompute + signed sqrt + scale, single output write.
    if NK == 1:
        out_kernel = functools.partial(_out_kernel, tm=TM, inv_hw=inv_hw)
        grid2 = (B, NT)
        x_spec2 = pl.BlockSpec((1, C, TK), lambda b, i: (b, 0, 0))
        out_spec = pl.BlockSpec((1, TM, C), lambda b, i: (b, i, 0))
        scratch2 = []
        sem2 = ("parallel", "parallel")
    else:
        out_kernel = functools.partial(_out_kernel_ktiled, tm=TM, inv_hw=inv_hw)
        grid2 = (B, NT, NK)
        x_spec2 = pl.BlockSpec((1, C, TK), lambda b, i, k: (b, 0, k))
        out_spec = pl.BlockSpec((1, TM, C), lambda b, i, k: (b, i, 0))
        scratch2 = [pltpu.VMEM((TM, C), jnp.float32)]
        sem2 = ("parallel", "parallel", "arbitrary")

    inv_spec = pl.BlockSpec(memory_space=pltpu.MemorySpace.SMEM)     # (B,) scalars

    out = pl.pallas_call(
        out_kernel,
        out_shape=jax.ShapeDtypeStruct((B, C, C), out_dtype),
        grid_spec=pltpu.PrefetchScalarGridSpec(
            num_scalar_prefetch=0,
            grid=grid2,
            in_specs=[x_spec2, inv_spec],
            out_specs=out_spec,
            scratch_shapes=scratch2,
        ),
        compiler_params=pltpu.CompilerParams(
            dimension_semantics=sem2,
            vmem_limit_bytes=vmem_limit,
        ),
        cost_estimate=pl.CostEstimate(
            flops=int(matmul_flops + 5 * B * C * C),
            transcendentals=int(B * C * C),
            bytes_accessed=int(B * C * HW * in_bytes + B * 4
                               + B * C * C * jnp.dtype(out_dtype).itemsize),
        ),
    )(x2, inv)

    return out.reshape(B, C * C)


# ---------------------------------------------------------------------------
# Pure-JAX reference mirroring the PyTorch module (is_vec=True)
# ---------------------------------------------------------------------------
def bcnn_reference(x):
    B, C, H, W = x.shape
    HW = H * W
    xf = x.reshape(B, C, HW)
    g = jnp.einsum("bcn,bdn->bcd", xf, xf) / HW
    y = jnp.sign(g) * jnp.sqrt(jnp.abs(g) + THRESH)
    y = y.reshape(B, C * C)
    n = jnp.sqrt(jnp.sum(y * y, axis=1, keepdims=True))
    return y / jnp.maximum(n, L2_EPS)


if __name__ == "__main__":
    key = jax.random.PRNGKey(0)

    # Small shapes consistent with the module's forward: (B, C, H, W).
    B, C, H, W = 2, 32, 8, 8
    x = jax.random.normal(key, (B, C, H, W), dtype=jnp.float32)
    ref = bcnn_reference(x)

    # Default path: bf16 MXU inputs, f32 accumulation / sqrt / normalize.
    out = jax.block_until_ready(bcnn_forward(x))
    assert out.shape == (B, C * C)
    assert bool(jnp.all(jnp.isfinite(out)))
    assert jnp.allclose(out, ref, atol=2e-2), "bf16 path mismatch vs reference"

    # f32 opt-in, exercising the multi-row-tile layout used at real C=2048.
    out_f32 = jax.block_until_ready(
        bcnn_forward(x, matmul_dtype=jnp.float32, block_rows=8))
    assert jnp.allclose(out_f32, ref, atol=1e-4, rtol=1e-4), "f32 path mismatch"

    # K-tiled (HW) accumulator path: the fallback used when the resident
    # operand would not fit VMEM (e.g. large feature maps on v7x's 64 MiB).
    B2, C2, H2, W2 = 2, 32, 16, 16
    x_kt = jax.random.normal(jax.random.PRNGKey(1), (B2, C2, H2, W2), jnp.float32)
    ref_kt = bcnn_reference(x_kt)
    out_kt = jax.block_until_ready(
        bcnn_forward(x_kt, matmul_dtype=jnp.float32, block_rows=8, block_hw=128))
    assert jnp.allclose(out_kt, ref_kt, atol=1e-4, rtol=1e-4), "K-tiled path mismatch"

    print("KERNEL_OK")
</pallas_src>

<mosaic_0001>
module attributes {stable_mosaic.version = 11 : i64} {
  func.func @_norm_kernel(%arg0: i32, %arg1: i32, %arg2: memref<1x32x64xbf16, #tpu.memory_space<vmem>>, %arg3: memref<1x32x1xf32, #tpu.memory_space<vmem>>) attributes {dimension_semantics = [#tpu.dimension_semantics<parallel>, #tpu.dimension_semantics<parallel>], iteration_bounds = array<i64: 2, 1>, scalar_prefetch = 0 : i64, scratch_operands = 0 : i64, tpu.core_type = #tpu.core_type<tc>, window_params = [{transform_indices = @transform_0, window_bounds = array<i64: 1, 32, 64>}, {transform_indices = @transform_1, window_bounds = array<i64: 1, 32, 1>}]} {
    %c32_i32 = arith.constant 32 : i32
    %0 = arith.muli %arg1, %c32_i32 : i32
    %1 = tpu.assume_multiple %0, 32 : i32
    %c0 = arith.constant 0 : index
    %2 = arith.index_cast %1 : i32 to index
    %c0_0 = arith.constant 0 : index
    %3 = vector.load %arg2[%c0, %2, %c0_0] : memref<1x32x64xbf16, #tpu.memory_space<vmem>>, vector<1x32x64xbf16>
    %4 = vector.shape_cast %3 : vector<1x32x64xbf16> to vector<32x64xbf16>
    %c0_1 = arith.constant 0 : index
    %c0_2 = arith.constant 0 : index
    %c0_3 = arith.constant 0 : index
    %5 = vector.load %arg2[%c0_1, %c0_2, %c0_3] : memref<1x32x64xbf16, #tpu.memory_space<vmem>>, vector<1x32x64xbf16>
    %6 = vector.shape_cast %5 : vector<1x32x64xbf16> to vector<32x64xbf16>
    %cst = arith.constant dense<0.000000e+00> : vector<32x32xf32>
    %7 = tpu.matmul %4, %6, %cst {dimension_numbers = #tpu.dot_dimension_numbers<[1], [1], [0], [0], [0, 0, 1, 0], [], []>} : vector<32x64xbf16>, vector<32x64xbf16>, vector<32x32xf32> -> vector<32x32xf32>
    %cst_4 = arith.constant 1.562500e-02 : f32
    %8 = vector.broadcast %cst_4 : f32 to vector<32x32xf32>
    %9 = arith.mulf %7, %8 : vector<32x32xf32>
    %10 = math.absf %9 : vector<32x32xf32>
    %cst_5 = arith.constant dense<0.000000e+00> : vector<32xf32>
    %11 = vector.multi_reduction <add>, %10, %cst_5 [1] : vector<32x32xf32> to vector<32xf32>
    %12 = vector.shape_cast %11 : vector<32xf32> to vector<32x1xf32>
    %c0_6 = arith.constant 0 : index
    %c0_7 = arith.constant 0 : index
    %c0_8 = arith.constant 0 : index
    %13 = vector.load %arg3[%c0_6, %c0_7, %c0_8] : memref<1x32x1xf32, #tpu.memory_space<vmem>>, vector<1x32x1xf32>
    %14 = vector.shape_cast %13 : vector<1x32x1xf32> to vector<32x1xf32>
    %15 = vector.shape_cast %12 : vector<32x1xf32> to vector<1x32x1xf32>
    tpu.vector_store %arg3[%c0_6, %c0_7, %c0_8], %15 {strides = array<i32>} : memref<1x32x1xf32, #tpu.memory_space<vmem>>, vector<1x32x1xf32>,
    return
  }
  func.func @transform_0(%arg0: i32, %arg1: i32) -> (i32, i32, i32) {
    %c0_i32 = arith.constant 0 : i32
    %c0_i32_0 = arith.constant 0 : i32
    %c0_i32_1 = arith.constant 0 : i32
    return %arg0, %c0_i32, %c0_i32_0 : i32, i32, i32
  }
  func.func @transform_1(%arg0: i32, %arg1: i32) -> (i32, i32, i32) {
    %c0_i32 = arith.constant 0 : i32
    %c0_i32_0 = arith.constant 0 : i32
    return %arg0, %arg1, %c0_i32 : i32, i32, i32
  }
}

</mosaic_0001>

<llo_original>
// kernel: tpu_custom_call.1
$region0: #{tpu_custom_call.1}
  #allocation0 [shape = 'u32[]', space=smem, size = 0x4, offset = 0x4, fixed_abs, tag = 'smem constant byte address 0x4 - core index']
  #allocation1 [shape = 'u32[144,128]{1,0:T(1,128)}', space=vmem, size = 0x12000, scoped, tag = 'internal scratch']
  %s0 = inlined_call_operand.hbm [shape: bf16[2,32,64], index: 0, kind: input, shape index: {}]
  %s1 = inlined_call_operand.vmem [shape: f32[2,32,1], index: 1, kind: output, shape index: {}]
  %s2 = sld [smem:[#allocation0]]
  $region41: #{tpu_custom_call.1} parent=0
    _
  %s4 = ssub.s32 1, %s2
  %s5 = scalar_select 0, %s4, %s2
  $region1: #{tpu_custom_call.1} parent=0
    #allocation2 [shape = 'u8[16384]{0}', space=vmem, size = 0x4000, scoped, tag = 'input window, operand 0']
    #allocation3 [shape = 's32[2]{0}', space=sflag, size = 0x8, scoped, tag = 'scoped memory for tpu_custom_call.1']
    %6 = vsyncpa [#allocation3], 0
    %s7 = scalar_lea.sflag [#allocation3], 1
    %8 = vsyncpa %s7, 0
    loop: start=0, step=1, limit=4
    $region2: #{tpu_custom_call.1} parent=1 // loop_pre_header
      _
    $region3: #{tpu_custom_call.1} parent=1 // loop_header
      %s10 = sphi 0, %s14
      %p11 = scmp.ge.s32.totalorder %s10, 4
      %s17 = sphi 0, %s29
      %s18 = sphi 0, %s25
      %s19 = sphi 0, %s17
      %s20 = sphi 0, %s18
      %s21 = sphi 0, %s19
      %s22 = sphi 0, %s20
      %s32 = sphi 0, %s34
      %s35 = sphi 0, %s32
      %s36 = sphi 0, %s35
      %s52 = sphi 0, %s36
      %s60 = sphi 0, %s62
      %s63 = sphi 0, %s60
      %s64 = sphi 0, %s63
      %s80 = sphi 0, %s64
    $region4: #{tpu_custom_call.1} parent=1 // loop_header_branch
      %13 = sbr.rel (%p11) target = $region8
    $region5: #{tpu_custom_call.1} parent=1 // loop_body
      %s15 = ssub.s32 %s10, 1
      %s16 = ssub.s32 %s10, 2
      %s23 = sadd.s32 1, %s18
      %p24 = scmp.ge.s32.totalorder %s23, 1
      %s25 = scalar_select %p24, 0, %s23
      %s26 = sadd.s32 1, %s17
      %s27 = scalar_select %p24, %s26, %s17
      %p28 = scmp.ge.s32.totalorder %s27, 2
      %s29 = scalar_select %p28, 0, %s27
      %s30 = ssub.s32 %s17, %s29
      %p31 = scmp.eq.s32.totalorder %s30, 0
      %s33 = sadd.s32 %s32, 1
      %s34 = scalar_select %p31, %s32, %s33
      %p37 = pneg %p31
      %p38 = scmp.eq.s32.totalorder %s10, 1
      %p39 = por %p37, %p38
      %p40 = scmp.ne.s32.totalorder %s32, %s35
      %p41 = scmp.eq.s32.totalorder %s10, 0
      %p42 = por %p40, %p41
      %p43 = scmp.ne.s32.totalorder %s32, %s35
      %p44 = scmp.eq.s32.totalorder %s15, 1
      %p45 = por %p43, %p44
      %p46 = scmp.ne.s32.totalorder %s35, %s36
      %p47 = scmp.eq.s32.totalorder %s15, 0
      %p48 = por %p46, %p47
      %p49 = scmp.ne.s32.totalorder %s35, %s36
      %p50 = scmp.eq.s32.totalorder %s16, 1
      %p51 = por %p49, %p50
      %p53 = scmp.ne.s32.totalorder %s36, %s52
      %p54 = scmp.eq.s32.totalorder %s16, 0
      %p55 = por %p53, %p54
      %s56 = ssub.s32 %s17, %s29
      %s57 = ssub.s32 %s18, %s25
      %s58 = sor.u32 %s56, %s57
      %p59 = scmp.eq.s32.totalorder %s58, 0
      %s61 = sadd.s32 %s60, 1
      %s62 = scalar_select %p59, %s60, %s61
      %p65 = pneg %p59
      %p66 = scmp.eq.s32.totalorder %s10, 1
      %p67 = por %p65, %p66
      %p68 = scmp.ne.s32.totalorder %s60, %s63
      %p69 = scmp.eq.s32.totalorder %s10, 0
      %p70 = por %p68, %p69
      %p71 = scmp.ne.s32.totalorder %s60, %s63
      %p72 = scmp.eq.s32.totalorder %s15, 1
      %p73 = por %p71, %p72
      %p74 = scmp.ne.s32.totalorder %s63, %s64
      %p75 = scmp.eq.s32.totalorder %s15, 0
      %p76 = por %p74, %p75
      %p77 = scmp.ne.s32.totalorder %s63, %s64
      %p78 = scmp.eq.s32.totalorder %s16, 1
      %p79 = por %p77, %p78
      %p81 = scmp.ne.s32.totalorder %s64, %s80
      %p82 = scmp.eq.s32.totalorder %s16, 0
      %p83 = por %p81, %p82
      %p84 = scmp.le.s32.totalorder 1, %s10
      %p85 = scmp.lt.s32.totalorder %s10, 3
      %p86 = pnand %p84, %p85
      %p87 = pneg %p86
      // Predicated region
      $region9: #{tpu_custom_call.1} parent=5 // pred_check
        _
      $region10: #{tpu_custom_call.1} parent=5 // pred_check_branch
        %89 = sbr.rel (%p86) target = $region12
      $region11: #{tpu_custom_call.1} parent=5 // pred_region
        %s90 = ssub.s32 %s10, 1
      $region12: #{tpu_custom_call.1} parent=5 // pred_fallthru
        _
      %p91 = scmp.lt.s32.totalorder %s10, 2
      // Predicated region
      $region13: #{tpu_custom_call.1} parent=5 // pred_check
        %p92 = pneg %p91
      $region14: #{tpu_custom_call.1} parent=5 // pred_check_branch
        %94 = sbr.rel (%p92) target = $region16
      $region15: #{tpu_custom_call.1} parent=5 // pred_region
        // Predicated region
        $region17: #{tpu_custom_call.1} parent=15 // pred_check
          %p95 = pneg %p42
        $region18: #{tpu_custom_call.1} parent=15 // pred_check_branch
          %97 = sbr.rel (%p95) target = $region20
        $region19: #{tpu_custom_call.1} parent=15 // pred_region
          %s98 = sand.u32 %s32, 1
          %s99 = scalar_lea.sflag [#allocation3], %s98
          %s100 = sand.u32 %s32, 1
          %s101 = smul.addr %s100, 16
          %s102 = scalar_lea.vmem [#allocation2], %s101
          %s104 = ssub.s32 256, 256
          %105 = vsyncadd %s99, %s104
          %s106 = smul.addr %s17, 4
          %s107 = smul.addr %s106, 64
          %s108 = scalar_lea.hbm %s0, %s107
          %s109 = sshll.u32 %s102, 4
          %s110 = int_to_ptr.vmem [resolvable:$true] %s109
          %115 = dma.hbm_to_vmem [thread:$0]  %s108, 256, %s110, %s99, 64, 64, 4
        $region20: #{tpu_custom_call.1} parent=15 // pred_fallthru
          _
      $region16: #{tpu_custom_call.1} parent=5 // pred_fallthru
        _
      %p116 = scmp.le.s32.totalorder 1, %s10
      %p117 = scmp.lt.s32.totalorder %s10, 3
      %p118 = pnand %p116, %p117
      %p119 = pneg %p118
      // Predicated region
      $region21: #{tpu_custom_call.1} parent=5 // pred_check
        _
      $region22: #{tpu_custom_call.1} parent=5 // pred_check_branch
        %121 = sbr.rel (%p118) target = $region24
      $region23: #{tpu_custom_call.1} parent=5 // pred_region
        %s122 = ssub.s32 %s10, 1
        %s123 = sand.u32 %s35, 1
        %s124 = scalar_lea.sflag [#allocation3], %s123
        %s125 = sand.u32 %s35, 1
        %s126 = smul.addr %s125, 16
        %s127 = scalar_lea.vmem [#allocation2], %s126
        // Predicated region
        $region25: #{tpu_custom_call.1} parent=23 // pred_check
          %p128 = pneg %p48
        $region26: #{tpu_custom_call.1} parent=23 // pred_check_branch
          %130 = sbr.rel (%p128) target = $region28
        $region27: #{tpu_custom_call.1} parent=23 // pred_region
          %131 = dma.done %s124, 256
        $region28: #{tpu_custom_call.1} parent=23 // pred_fallthru
          _
        %s132 = sand.u32 %s35, 1
        %s133 = scalar_lea.sflag [#allocation3], %s132
        %s134 = sand.u32 %s35, 1
        %s135 = smul.addr %s134, 16
        %s136 = scalar_lea.vmem [#allocation2], %s135
        %p137 = pneg %p48
        %p138 = pneg %p45
        %p139 = pneg %p76
        %p140 = pneg %p73
        %s141 = smul.u32 4, %s20
        %p142 = scmp.lt.s32.totalorder %s19, 1
        %s143 = scalar_select %p142, %s19, 1
        %p144 = scmp.lt.s32.totalorder %s141, 3
        %s145 = scalar_select %p144, %s141, 3
        %s146 = smul.addr %s143, 4
        %s147 = sadd.s32 %s145, %s146
        %s148 = smul.addr %s147, 8
        %s149 = scalar_lea.vmem %s1, %s148
        %s150 = smul.u32 4, %s20
        %p151 = scmp.lt.s32.totalorder %s19, 1
        %s152 = scalar_select %p151, %s19, 1
        %p153 = scmp.lt.s32.totalorder %s150, 3
        %s154 = scalar_select %p153, %s150, 3
        %s155 = smul.addr %s152, 4
        %s156 = sadd.s32 %s154, %s155
        %s157 = smul.addr %s156, 8
        %s158 = scalar_lea.vmem %s1, %s157
        %s159 = smul.u32 4, %s20
        %s161 = smul.u32 %s20, 32
        %s162 = sshra.s32 %s161, 3
        %s163 = sand.u32 %s161, 7
        %s164 = smul.addr %s162, 4
        %s165 = scalar_lea.vmem %s127, %s164 [#allocation2]
        %v166 = vld [vmem:[%s165] sm:$0xf]
        %v167 = vld [vmem:[%s165 + $0x4] sm:$0xf]
        %v168 = vld [vmem:[%s165 + $0x8] sm:$0xf]
        %v169 = vld [vmem:[%s165 + $0xc] sm:$0xf]
        %v170 = vld [vmem:[%s127] sm:$0xf]
        %v171 = vld [vmem:[%s127 + $0x4] sm:$0xf]
        %v172 = vld [vmem:[%s127 + $0x8] sm:$0xf]
        %v173 = vld [vmem:[%s127 + $0xc] sm:$0xf]
        %v178 = vunpack.c.l.b16 %v166
        %v179 = vunpack.c.l.b16 %v167
        %v180 = vunpack.c.l.b16 %v168
        %v181 = vunpack.c.l.b16 %v169
        %v182 = vpack.c.b16 %v179, %v178
        %v183 = vpack.c.b16 %v181, %v180
        %v188 = vunpack.c.l.b16 %v170
        %v189 = vunpack.c.l.b16 %v171
        %v190 = vunpack.c.l.b16 %v172
        %v191 = vunpack.c.l.b16 %v173
        %v192 = vpack.c.b16 %v189, %v188
        %v193 = vpack.c.b16 %v191, %v190
        %vm194 = vcmask 523264
        %v196 = vsel %vm194, %v182, 0
        %v199 = vsel %vm194, %v183, 0
        %v202 = vsel %vm194, %v192, 0
        %v205 = vsel %vm194, %v193, 0
        %207 = vmatprep.subr.bf16.mxu0 0
        %208 = vmatpush1.bf16.xpose.msra.mxu0 0
        %209 = vmatprep.subr.bf16.mxu0 0
        %210 = vmatpush1.bf16.xpose.msra.mxu0 0
        %211 = vmatprep.subr.bf16.mxu0 0
        %212 = vmatpush1.bf16.xpose.msra.mxu0 0
        %213 = vmatprep.subr.bf16.mxu0 0
        %214 = vmatpush1.bf16.xpose.msra.mxu0 0
        %215 = vmatprep.subr.bf16.mxu0 0
        %216 = vmatpush1.bf16.xpose.msra.mxu0 0
        %217 = vmatprep.subr.bf16.mxu0 0
        %218 = vmatpush1.bf16.xpose.msra.mxu0 0
        %219 = vmatprep.subr.bf16.mxu0 0
        %220 = vmatpush1.bf16.xpose.msra.mxu0 %v205
        %221 = vmatprep.subr.bf16.mxu0 0
        %222 = vmatpush1.bf16.xpose.msra.mxu0 %v202
        %223 = vmatprep.subr.bf16.mxu0 0
        %224 = vmatpush2.bf16.xpose.msra.mxu0 0
        %225 = vmatprep.subr.bf16.mxu0 0
        %226 = vmatpush2.bf16.xpose.msra.mxu0 0
        %227 = vmatprep.subr.bf16.mxu0 0
        %228 = vmatpush2.bf16.xpose.msra.mxu0 0
        %229 = vmatprep.subr.bf16.mxu0 0
        %230 = vmatpush2.bf16.xpose.msra.mxu0 0
        %231 = vmatprep.subr.bf16.mxu0 0
        %232 = vmatpush2.bf16.xpose.msra.mxu0 0
        %233 = vmatprep.subr.bf16.mxu0 0
        %234 = vmatpush2.bf16.xpose.msra.mxu0 0
        %235 = vmatprep.subr.bf16.mxu0 0
        %236 = vmatpush2.bf16.xpose.msra.mxu0 0
        %237 = vmatprep.subr.bf16.mxu0 0
        %238 = vmatpush2.bf16.xpose.msra.mxu0 0
        %239 = vmatprep.mubr.bf16.mxu0 0
        %240 = vmatmul.mubr.bf16.gmra.mxu0 %v196
        %v241 = vpop.f32.mrf.mxu0
        %v242 = vadd.f32 0.0, %v241
        %v243 = vpop.f32.mrf.mxu0
        %v244 = vpop.f32.mrf.mxu0
        %v245 = vadd.f32 0.0, %v244
        %v246 = vpop.f32.mrf.mxu0
        %247 = vmatprep.mubr.bf16.mxu0 0
        %248 = vmatmul.mubr.bf16.gmra.mxu0 %v199
        %v249 = vpop.f32.mrf.mxu0
        %v250 = vadd.f32 0.0, %v249
        %v251 = vpop.f32.mrf.mxu0
        %v252 = vpop.f32.mrf.mxu0
        %v253 = vadd.f32 0.0, %v252
        %v254 = vpop.f32.mrf.mxu0
        %255 = vdwg.mxu0
        %v256 = vmul.f32 %v242, 0.015625
        %v257 = vmul.f32 %v245, 0.015625
        %v258 = vmul.f32 %v250, 0.015625
        %v259 = vmul.f32 %v253, 0.015625
        %v260 = vand.u32 2147483647, %v256
        %v261 = vand.u32 2147483647, %v257
        %v262 = vand.u32 2147483647, %v258
        %v263 = vand.u32 2147483647, %v259
        %vm264 = vcmask 261120
        %v265 = vsel %vm264, %v260, 0.0
        %266 = vadd.xlane.f32.xlu0 %v265
        %v267 = vpop.xlane.xlu0 %266
        %v268 = vsel %vm264, %v261, 0.0
        %269 = vadd.xlane.f32.xlu0 %v268
        %v270 = vpop.xlane.xlu0 %269
        %v271 = vsel %vm264, %v262, 0.0
        %272 = vadd.xlane.f32.xlu0 %v271
        %v273 = vpop.xlane.xlu0 %272
        %v274 = vsel %vm264, %v263, 0.0
        %275 = vadd.xlane.f32.xlu0 %v274
        %v276 = vpop.xlane.xlu0 %275
        %vm277 = vcmask 7168
        %278 = vst.msk [vmem:[%s158] sm:$0xff] %vm277, %v267
        %279 = vst.msk [vmem:[%s158 + $0x8] sm:$0xff] %vm277, %v270
        %280 = vst.msk [vmem:[%s158 + $0x10] sm:$0xff] %vm277, %v273
        %281 = vst.msk [vmem:[%s158 + $0x18] sm:$0xff] %vm277, %v276
        %s282 = smul.u32 4, %s20
        %p283 = scmp.lt.s32.totalorder %s19, 1
        %s284 = scalar_select %p283, %s19, 1
        %p285 = scmp.lt.s32.totalorder %s282, 3
        %s286 = scalar_select %p285, %s282, 3
        %s287 = smul.addr %s284, 4
        %s288 = sadd.s32 %s286, %s287
        %s289 = smul.addr %s288, 8
        %s290 = scalar_lea.vmem %s1, %s289
        // Predicated region
        $region29: #{tpu_custom_call.1} parent=23 // pred_check
          %p291 = pneg %p73
        $region30: #{tpu_custom_call.1} parent=23 // pred_check_branch
          %293 = sbr.rel (%p291) target = $region32
        $region31: #{tpu_custom_call.1} parent=23 // pred_region
          %s294 = smul.u32 4, %s20
        $region32: #{tpu_custom_call.1} parent=23 // pred_fallthru
          _
      $region24: #{tpu_custom_call.1} parent=5 // pred_fallthru
        _
      %p295 = scmp.le.s32.totalorder 2, %s10
      // Predicated region
      $region33: #{tpu_custom_call.1} parent=5 // pred_check
        %p296 = pneg %p295
      $region34: #{tpu_custom_call.1} parent=5 // pred_check_branch
        %298 = sbr.rel (%p296) target = $region36
      $region35: #{tpu_custom_call.1} parent=5 // pred_region
        %s299 = ssub.s32 %s10, 2
        // Predicated region
        $region37: #{tpu_custom_call.1} parent=35 // pred_check
          %p300 = pneg %p79
        $region38: #{tpu_custom_call.1} parent=35 // pred_check_branch
          %302 = sbr.rel (%p300) target = $region40
        $region39: #{tpu_custom_call.1} parent=35 // pred_region
          %s303 = smul.u32 4, %s22
          %p304 = scmp.lt.s32.totalorder %s21, 1
          %s305 = scalar_select %p304, %s21, 1
          %p306 = scmp.lt.s32.totalorder %s303, 3
          %s307 = scalar_select %p306, %s303, 3
          %s308 = smul.addr %s305, 4
          %s309 = sadd.s32 %s307, %s308
          %s310 = smul.addr %s309, 8
          %s311 = scalar_lea.vmem %s1, %s310
        $region40: #{tpu_custom_call.1} parent=35 // pred_fallthru
          _
      $region36: #{tpu_custom_call.1} parent=5 // pred_fallthru
        _
    $region6: #{tpu_custom_call.1} parent=1 // loop_footer
      %s14 = sadd.s32 1, %s10
    $region7: #{tpu_custom_call.1} parent=1 // loop_footer_branch
      %9 = sbr.rel target = $region3
    $region8: #{tpu_custom_call.1} parent=1 // loop_exit
      _
    %312 = vsyncpa [#allocation3], 1
    %s313 = scalar_lea.sflag [#allocation3], 1
    %314 = vsyncpa %s313, 1

</llo_original>
